<compile_context>
chip_gen: v6e
topology: v6e:2x2x1
jax: 0.10.0
libtpu: 0.0.40
codegen_flags: <defaults>
</compile_context>

<pallas_src>
import functools

import jax
import jax.numpy as jnp
from jax import lax
from jax.experimental import pallas as pl
from jax.experimental.pallas import tpu as pltpu

_LANE = 128


def _round_up(x, m):
    return (x + m - 1) // m * m


def _conv_tile(x_ref, w_ref, mt, *, k, stride, tl, c_pad, win_load):
    """Conv output tile (TL, C_pad) as K shifted matmuls, f32 accumulate."""
    row0 = pl.multiple_of(mt * (tl * stride), 8)
    win = x_ref[0, pl.ds(row0, win_load), :]                  # (win_load, C_in)
    acc = jnp.zeros((tl, c_pad), jnp.float32)
    for t in range(k):                                        # small static K
        if stride == 1:
            xs = win[t:t + tl, :]
        else:
            xs = lax.slice(win, (t, 0),
                           (t + (tl - 1) * stride + 1, win.shape[1]),
                           (stride, 1))
        acc = acc + jnp.dot(xs, w_ref[t], preferred_element_type=jnp.float32)
    return acc


def _stats_kernel(x_ref, w_ref, stats_ref, *,
                  k, stride, tl, l_out, c_pad, win_load):
    """BN pass 1: per-sample, per-channel [sum; sum_sq] of the conv output,
    resident across L tiles (reduction axis last, 'arbitrary')."""
    mt = pl.program_id(1)

    @pl.when(mt == 0)
    def _():
        stats_ref[...] = jnp.zeros_like(stats_ref)

    acc = _conv_tile(x_ref, w_ref, mt, k=k, stride=stride, tl=tl,
                     c_pad=c_pad, win_load=win_load)

    # Mask rows beyond the true L_out so tile padding never biases the stats.
    rows = mt * tl + lax.broadcasted_iota(jnp.int32, (tl, 1), 0)
    yv = acc * (rows < l_out).astype(jnp.float32)
    s = jnp.sum(yv, axis=0, keepdims=True)                    # (1, C_pad)
    ss = jnp.sum(yv * yv, axis=0, keepdims=True)              # (1, C_pad)
    stats_ref[0] = stats_ref[0] + jnp.concatenate([s, ss], axis=0)


def _conv_bn_relu_kernel(x_ref, w_ref, sc_ref, o_ref, *,
                         k, stride, tl, c_pad, win_load):
    """Pass 2: recompute conv tile, apply folded scale/shift + ReLU,
    store lane-dense (TL, C_pad)."""
    mt = pl.program_id(1)
    acc = _conv_tile(x_ref, w_ref, mt, k=k, stride=stride, tl=tl,
                     c_pad=c_pad, win_load=win_load)
    sc = sc_ref[...]                                          # (2, C_pad)
    o_ref[0] = jnp.maximum(acc * sc[0:1, :] + sc[1:2, :], 0.0)


def conv_block_forward(x, weight, bias, gamma, beta, *, stride,
                       eps=1e-5, tile_l=512):
    """x: (N, C_in, L) f32; weight: (C_out, C_in, K). Returns (N, C_out, L_out)."""
    # Conv bias is exactly cancelled by the train-mode BN mean subtraction.
    del bias
    n, c_in, l_in = x.shape
    c_out, _, k = weight.shape
    dilation = 1

    # "same" padding, identical to conv1d_same_padding.
    padding = (l_in - 1) * stride - l_in + dilation * (k - 1) + 1
    pad_extra = 1 if padding % 2 != 0 else 0
    p_half = padding // 2
    l_padded = l_in + pad_extra + 2 * p_half
    l_out = (l_padded - dilation * (k - 1) - 1) // stride + 1

    # Tiling / padding plan.
    c_pad = _round_up(c_out, _LANE)                 # lane-dense channel dim
    tl = min(tile_l, _round_up(l_out, 8))           # rows per L tile (mult. of 8)
    l_out_pad = _round_up(l_out, tl)
    n_mt = l_out_pad // tl
    win_rows = (tl - 1) * stride + k                # input rows feeding one tile
    win_load = _round_up(win_rows, 8)
    l_slab = max((n_mt - 1) * tl * stride + win_load, l_padded)

    # Channels-last input slab (no im2col): (N, L_slab, C_in), zero-padded.
    # Left pad = p_half; right pad covers the extra "same"-padding element plus
    # tile/window rounding.
    x_cl = jnp.transpose(x, (0, 2, 1)).astype(jnp.float32)
    x_cl = jnp.pad(x_cl, ((0, 0), (p_half, l_slab - l_in - p_half), (0, 0)))

    # Per-tap weights: (C_out, C_in, K) -> (K, C_in, C_pad), C_out zero-padded.
    w = jnp.transpose(weight, (2, 1, 0)).astype(jnp.float32)
    w = jnp.pad(w, ((0, 0), (0, 0), (0, c_pad - c_out)))

    common = dict(k=k, stride=stride, tl=tl, c_pad=c_pad, win_load=win_load)

    # Pass 1: per-sample channel sums / sums-of-squares of the conv output.
    stats = pl.pallas_call(
        functools.partial(_stats_kernel, l_out=l_out, **common),
        out_shape=jax.ShapeDtypeStruct((n, 2, c_pad), jnp.float32),
        grid=(n, n_mt),
        in_specs=[
            pl.BlockSpec((1, l_slab, c_in), lambda b, m: (b, 0, 0)),
            pl.BlockSpec((k, c_in, c_pad), lambda b, m: (0, 0, 0)),
        ],
        out_specs=pl.BlockSpec((1, 2, c_pad), lambda b, m: (b, 0, 0)),
        compiler_params=pltpu.CompilerParams(
            dimension_semantics=("parallel", "arbitrary"),
            vmem_limit_bytes=32 * 1024 * 1024),
    )(x_cl, w)

    # Tiny O(C_out) glue: finish the cross-batch reduction and fold gamma/beta
    # with the batch statistics into one per-channel scale/shift pair.
    m_count = jnp.float32(n * l_out)
    tot = jnp.sum(stats, axis=0)                              # (2, C_pad)
    mean = tot[0] / m_count
    var = jnp.maximum(tot[1] / m_count - mean * mean, 0.0)    # biased batch var
    gamma_p = jnp.pad(gamma.astype(jnp.float32), (0, c_pad - c_out))
    beta_p = jnp.pad(beta.astype(jnp.float32), (0, c_pad - c_out))
    scale = gamma_p * lax.rsqrt(var + eps)
    shift = beta_p - mean * scale
    sc = jnp.stack([scale, shift], axis=0)                    # (2, C_pad)

    # Pass 2: fused conv + BN + ReLU, lane-dense output written once.
    out = pl.pallas_call(
        functools.partial(_conv_bn_relu_kernel, **common),
        out_shape=jax.ShapeDtypeStruct((n, l_out_pad, c_pad), jnp.float32),
        grid=(n, n_mt),
        in_specs=[
            pl.BlockSpec((1, l_slab, c_in), lambda b, m: (b, 0, 0)),
            pl.BlockSpec((k, c_in, c_pad), lambda b, m: (0, 0, 0)),
            pl.BlockSpec((2, c_pad), lambda b, m: (0, 0)),
        ],
        out_specs=pl.BlockSpec((1, tl, c_pad), lambda b, m: (b, m, 0)),
        compiler_params=pltpu.CompilerParams(
            dimension_semantics=("parallel", "parallel"),
            vmem_limit_bytes=32 * 1024 * 1024),
    )(x_cl, w, sc)

    # (N, L_out_pad, C_pad) -> (N, C_out, L_out)
    return jnp.transpose(out[:, :l_out, :c_out], (0, 2, 1))


def _reference(x, weight, bias, gamma, beta, *, stride, eps=1e-5):
    """Pure-JAX reference matching the PyTorch ConvBlock forward (train-mode BN)."""
    dilation = 1
    _, _, l_in = x.shape
    k = weight.shape[2]
    padding = (l_in - 1) * stride - l_in + dilation * (k - 1) + 1
    if padding % 2 != 0:
        x = jnp.pad(x, ((0, 0), (0, 0), (0, 1)))
    y = lax.conv_general_dilated(
        x, weight, window_strides=(stride,),
        padding=[(padding // 2, padding // 2)],
        dimension_numbers=("NCH", "OIH", "NCH"))
    y = y + bias[None, :, None]
    mean = jnp.mean(y, axis=(0, 2), keepdims=True)
    var = jnp.mean((y - mean) ** 2, axis=(0, 2), keepdims=True)
    y_hat = (y - mean) * lax.rsqrt(var + eps)
    return jnp.maximum(y_hat * gamma[None, :, None] + beta[None, :, None], 0.0)


if __name__ == "__main__":
    # Module hyperparameters.
    in_channels, out_channels, kernel_size, stride = 4, 8, 3, 1
    batch, length = 2, 16

    key = jax.random.PRNGKey(0)
    kx, kw, kb = jax.random.split(key, 3)

    x = jax.random.normal(kx, (batch, in_channels, length), dtype=jnp.float32)

    # Deterministic parameter init (same shapes as nn.Conv1d / nn.BatchNorm1d).
    fan_in = in_channels * kernel_size
    bound = 1.0 / (fan_in ** 0.5)
    weight = jax.random.uniform(
        kw, (out_channels, in_channels, kernel_size),
        minval=-bound, maxval=bound, dtype=jnp.float32)
    bias = jax.random.uniform(
        kb, (out_channels,), minval=-bound, maxval=bound, dtype=jnp.float32)
    gamma = jnp.ones((out_channels,), dtype=jnp.float32)
    beta = jnp.zeros((out_channels,), dtype=jnp.float32)

    ref = _reference(x, weight, bias, gamma, beta, stride=stride)

    # Default tiling (single L tile).
    fwd = jax.jit(functools.partial(conv_block_forward, stride=stride))
    out = fwd(x, weight, bias, gamma, beta)
    jax.block_until_ready(out)
    assert out.shape == (batch, out_channels, length), out.shape
    assert bool(jnp.all(out >= 0.0))  # ReLU sanity
    err = float(jnp.max(jnp.abs(out - ref)))
    assert err < 1e-4, f"max abs err vs reference (single tile): {err}"

    # Small tile_l to exercise the multi-tile grid + resident stats accumulator.
    fwd_mt = jax.jit(functools.partial(conv_block_forward, stride=stride, tile_l=8))
    out_mt = fwd_mt(x, weight, bias, gamma, beta)
    jax.block_until_ready(out_mt)
    err_mt = float(jnp.max(jnp.abs(out_mt - ref)))
    assert err_mt < 1e-4, f"max abs err vs reference (multi tile): {err_mt}"

    print("KERNEL_OK")
</pallas_src>

<mosaic_0001>
module attributes {stable_mosaic.version = 11 : i64} {
  func.func @_stats_kernel(%arg0: i32, %arg1: i32, %arg2: memref<1x24x4xf32, #tpu.memory_space<vmem>>, %arg3: memref<3x4x128xf32, #tpu.memory_space<vmem>>, %arg4: memref<1x2x128xf32, #tpu.memory_space<vmem>>) attributes {dimension_semantics = [#tpu.dimension_semantics<parallel>, #tpu.dimension_semantics<arbitrary>], iteration_bounds = array<i64: 2, 1>, scalar_prefetch = 0 : i64, scratch_operands = 0 : i64, tpu.core_type = #tpu.core_type<tc>, window_params = [{transform_indices = @transform_0, window_bounds = array<i64: 1, 24, 4>}, {pipeline_mode = #tpu.pipeline_mode<synchronous>, transform_indices = @transform_1, window_bounds = array<i64: 3, 4, 128>}, {transform_indices = @transform_2, window_bounds = array<i64: 1, 2, 128>}]} {
    %c0_i32 = arith.constant 0 : i32
    %0 = arith.cmpi eq, %arg1, %c0_i32 : i32
    %1 = arith.extui %0 : i1 to i32
    %c0_i32_0 = arith.constant 0 : i32
    %2 = arith.cmpi ne, %1, %c0_i32_0 : i32
    scf.if %2 {
      %cst_22 = arith.constant 0.000000e+00 : f32
      %46 = vector.broadcast %cst_22 : f32 to vector<1x2x128xf32>
      %c0_23 = arith.constant 0 : index
      %c0_24 = arith.constant 0 : index
      %c0_25 = arith.constant 0 : index
      %47 = vector.load %arg4[%c0_23, %c0_24, %c0_25] : memref<1x2x128xf32, #tpu.memory_space<vmem>>, vector<1x2x128xf32>
      tpu.vector_store %arg4[%c0_23, %c0_24, %c0_25], %46 {strides = array<i32>} : memref<1x2x128xf32, #tpu.memory_space<vmem>>, vector<1x2x128xf32>,
    } else {
    }
    %c16_i32 = arith.constant 16 : i32
    %3 = arith.muli %arg1, %c16_i32 : i32
    %4 = tpu.assume_multiple %3, 8 : i32
    %c0 = arith.constant 0 : index
    %5 = arith.index_cast %4 : i32 to index
    %c0_1 = arith.constant 0 : index
    %6 = vector.load %arg2[%c0, %5, %c0_1] : memref<1x24x4xf32, #tpu.memory_space<vmem>>, vector<1x24x4xf32>
    %7 = vector.shape_cast %6 : vector<1x24x4xf32> to vector<24x4xf32>
    %cst = arith.constant 0.000000e+00 : f32
    %8 = vector.broadcast %cst : f32 to vector<16x128xf32>
    %9 = vector.extract_strided_slice %7 {offsets = [0, 0], sizes = [16, 4], strides = [1, 1]} : vector<24x4xf32> to vector<16x4xf32>
    %c0_2 = arith.constant 0 : index
    %c0_3 = arith.constant 0 : index
    %c0_4 = arith.constant 0 : index
    %10 = vector.load %arg3[%c0_2, %c0_3, %c0_4] : memref<3x4x128xf32, #tpu.memory_space<vmem>>, vector<1x4x128xf32>
    %11 = vector.shape_cast %10 : vector<1x4x128xf32> to vector<4x128xf32>
    %cst_5 = arith.constant dense<0.000000e+00> : vector<16x128xf32>
    %12 = tpu.matmul %9, %11, %cst_5 {dimension_numbers = #tpu.dot_dimension_numbers<[1], [0], [0], [1], [0, 0, 1, 1], [], []>} : vector<16x4xf32>, vector<4x128xf32>, vector<16x128xf32> -> vector<16x128xf32>
    %13 = arith.addf %8, %12 : vector<16x128xf32>
    %14 = vector.extract_strided_slice %7 {offsets = [1, 0], sizes = [16, 4], strides = [1, 1]} : vector<24x4xf32> to vector<16x4xf32>
    %c1 = arith.constant 1 : index
    %c0_6 = arith.constant 0 : index
    %c0_7 = arith.constant 0 : index
    %15 = vector.load %arg3[%c1, %c0_6, %c0_7] : memref<3x4x128xf32, #tpu.memory_space<vmem>>, vector<1x4x128xf32>
    %16 = vector.shape_cast %15 : vector<1x4x128xf32> to vector<4x128xf32>
    %cst_8 = arith.constant dense<0.000000e+00> : vector<16x128xf32>
    %17 = tpu.matmul %14, %16, %cst_8 {dimension_numbers = #tpu.dot_dimension_numbers<[1], [0], [0], [1], [0, 0, 1, 1], [], []>} : vector<16x4xf32>, vector<4x128xf32>, vector<16x128xf32> -> vector<16x128xf32>
    %18 = arith.addf %13, %17 : vector<16x128xf32>
    %19 = vector.extract_strided_slice %7 {offsets = [2, 0], sizes = [16, 4], strides = [1, 1]} : vector<24x4xf32> to vector<16x4xf32>
    %c2 = arith.constant 2 : index
    %c0_9 = arith.constant 0 : index
    %c0_10 = arith.constant 0 : index
    %20 = vector.load %arg3[%c2, %c0_9, %c0_10] : memref<3x4x128xf32, #tpu.memory_space<vmem>>, vector<1x4x128xf32>
    %21 = vector.shape_cast %20 : vector<1x4x128xf32> to vector<4x128xf32>
    %cst_11 = arith.constant dense<0.000000e+00> : vector<16x128xf32>
    %22 = tpu.matmul %19, %21, %cst_11 {dimension_numbers = #tpu.dot_dimension_numbers<[1], [0], [0], [1], [0, 0, 1, 1], [], []>} : vector<16x4xf32>, vector<4x128xf32>, vector<16x128xf32> -> vector<16x128xf32>
    %23 = arith.addf %18, %22 : vector<16x128xf32>
    %c16_i32_12 = arith.constant 16 : i32
    %24 = arith.muli %arg1, %c16_i32_12 : i32
    %25 = tpu.iota {dimensions = array<i32: 0>} : vector<16x1xi32>
    %26 = vector.broadcast %24 : i32 to vector<16x1xi32>
    %27 = arith.addi %26, %25 : vector<16x1xi32>
    %c16_i32_13 = arith.constant 16 : i32
    %28 = vector.broadcast %c16_i32_13 : i32 to vector<16x1xi32>
    %29 = arith.cmpi slt, %27, %28 : vector<16x1xi32>
    %30 = arith.extui %29 : vector<16x1xi1> to vector<16x1xi32>
    %31 = arith.sitofp %30 : vector<16x1xi32> to vector<16x1xf32>
    %32 = vector.broadcast %31 : vector<16x1xf32> to vector<16x128xf32>
    %33 = arith.mulf %23, %32 : vector<16x128xf32>
    %cst_14 = arith.constant dense<0.000000e+00> : vector<128xf32>
    %34 = vector.multi_reduction <add>, %33, %cst_14 [0] : vector<16x128xf32> to vector<128xf32>
    %35 = vector.shape_cast %34 : vector<128xf32> to vector<1x128xf32>
    %36 = arith.mulf %33, %33 : vector<16x128xf32>
    %cst_15 = arith.constant dense<0.000000e+00> : vector<128xf32>
    %37 = vector.multi_reduction <add>, %36, %cst_15 [0] : vector<16x128xf32> to vector<128xf32>
    %38 = vector.shape_cast %37 : vector<128xf32> to vector<1x128xf32>
    %c0_16 = arith.constant 0 : index
    %c0_17 = arith.constant 0 : index
    %c0_18 = arith.constant 0 : index
    %39 = vector.load %arg4[%c0_16, %c0_17, %c0_18] : memref<1x2x128xf32, #tpu.memory_space<vmem>>, vector<1x2x128xf32>
    %40 = vector.shape_cast %39 : vector<1x2x128xf32> to vector<2x128xf32>
    %41 = tpu.concatenate %35, %38 in 0 : vector<1x128xf32>, vector<1x128xf32> -> vector<2x128xf32>
    %42 = arith.addf %40, %41 : vector<2x128xf32>
    %c0_19 = arith.constant 0 : index
    %c0_20 = arith.constant 0 : index
    %c0_21 = arith.constant 0 : index
    %43 = vector.load %arg4[%c0_19, %c0_20, %c0_21] : memref<1x2x128xf32, #tpu.memory_space<vmem>>, vector<1x2x128xf32>
    %44 = vector.shape_cast %43 : vector<1x2x128xf32> to vector<2x128xf32>
    %45 = vector.shape_cast %42 : vector<2x128xf32> to vector<1x2x128xf32>
    tpu.vector_store %arg4[%c0_19, %c0_20, %c0_21], %45 {strides = array<i32>} : memref<1x2x128xf32, #tpu.memory_space<vmem>>, vector<1x2x128xf32>,
    return
  }
  func.func @transform_0(%arg0: i32, %arg1: i32) -> (i32, i32, i32) {
    %c0_i32 = arith.constant 0 : i32
    %c0_i32_0 = arith.constant 0 : i32
    %c0_i32_1 = arith.constant 0 : i32
    return %arg0, %c0_i32, %c0_i32_0 : i32, i32, i32
  }
  func.func @transform_1(%arg0: i32, %arg1: i32) -> (i32, i32, i32) {
    %c0_i32 = arith.constant 0 : i32
    %c0_i32_0 = arith.constant 0 : i32
    %c0_i32_1 = arith.constant 0 : i32
    %c0_i32_2 = arith.constant 0 : i32
    return %c0_i32, %c0_i32_0, %c0_i32_1 : i32, i32, i32
  }
  func.func @transform_2(%arg0: i32, %arg1: i32) -> (i32, i32, i32) {
    %c0_i32 = arith.constant 0 : i32
    %c0_i32_0 = arith.constant 0 : i32
    %c0_i32_1 = arith.constant 0 : i32
    return %arg0, %c0_i32, %c0_i32_0 : i32, i32, i32
  }
}

module attributes {stable_mosaic.version = 11 : i64} {
  func.func @_conv_bn_relu_kernel(%arg0: i32, %arg1: i32, %arg2: memref<1x24x4xf32, #tpu.memory_space<vmem>>, %arg3: memref<3x4x128xf32, #tpu.memory_space<vmem>>, %arg4: memref<2x128xf32, #tpu.memory_space<vmem>>, %arg5: memref<1x16x128xf32, #tpu.memory_space<vmem>>) attributes {dimension_semantics = [#tpu.dimension_semantics<parallel>, #tpu.dimension_semantics<parallel>], iteration_bounds = array<i64: 2, 1>, scalar_prefetch = 0 : i64, scratch_operands = 0 : i64, tpu.core_type = #tpu.core_type<tc>, window_params = [{transform_indices = @transform_0, window_bounds = array<i64: 1, 24, 4>}, {pipeline_mode = #tpu.pipeline_mode<synchronous>, transform_indices = @transform_1, window_bounds = array<i64: 3, 4, 128>}, {pipeline_mode = #tpu.pipeline_mode<synchronous>, transform_indices = @transform_2, window_bounds = array<i64: 2, 128>}, {transform_indices = @transform_3, window_bounds = array<i64: 1, 16, 128>}]} {
    %c16_i32 = arith.constant 16 : i32
    %0 = arith.muli %arg1, %c16_i32 : i32
    %1 = tpu.assume_multiple %0, 8 : i32
    %c0 = arith.constant 0 : index
    %2 = arith.index_cast %1 : i32 to index
    %c0_0 = arith.constant 0 : index
    %3 = vector.load %arg2[%c0, %2, %c0_0] : memref<1x24x4xf32, #tpu.memory_space<vmem>>, vector<1x24x4xf32>
    %4 = vector.shape_cast %3 : vector<1x24x4xf32> to vector<24x4xf32>
    %cst = arith.constant 0.000000e+00 : f32
    %5 = vector.broadcast %cst : f32 to vector<16x128xf32>
    %6 = vector.extract_strided_slice %4 {offsets = [0, 0], sizes = [16, 4], strides = [1, 1]} : vector<24x4xf32> to vector<16x4xf32>
    %c0_1 = arith.constant 0 : index
    %c0_2 = arith.constant 0 : index
    %c0_3 = arith.constant 0 : index
    %7 = vector.load %arg3[%c0_1, %c0_2, %c0_3] : memref<3x4x128xf32, #tpu.memory_space<vmem>>, vector<1x4x128xf32>
    %8 = vector.shape_cast %7 : vector<1x4x128xf32> to vector<4x128xf32>
    %cst_4 = arith.constant dense<0.000000e+00> : vector<16x128xf32>
    %9 = tpu.matmul %6, %8, %cst_4 {dimension_numbers = #tpu.dot_dimension_numbers<[1], [0], [0], [1], [0, 0, 1, 1], [], []>} : vector<16x4xf32>, vector<4x128xf32>, vector<16x128xf32> -> vector<16x128xf32>
    %10 = arith.addf %5, %9 : vector<16x128xf32>
    %11 = vector.extract_strided_slice %4 {offsets = [1, 0], sizes = [16, 4], strides = [1, 1]} : vector<24x4xf32> to vector<16x4xf32>
    %c1 = arith.constant 1 : index
    %c0_5 = arith.constant 0 : index
    %c0_6 = arith.constant 0 : index
    %12 = vector.load %arg3[%c1, %c0_5, %c0_6] : memref<3x4x128xf32, #tpu.memory_space<vmem>>, vector<1x4x128xf32>
    %13 = vector.shape_cast %12 : vector<1x4x128xf32> to vector<4x128xf32>
    %cst_7 = arith.constant dense<0.000000e+00> : vector<16x128xf32>
    %14 = tpu.matmul %11, %13, %cst_7 {dimension_numbers = #tpu.dot_dimension_numbers<[1], [0], [0], [1], [0, 0, 1, 1], [], []>} : vector<16x4xf32>, vector<4x128xf32>, vector<16x128xf32> -> vector<16x128xf32>
    %15 = arith.addf %10, %14 : vector<16x128xf32>
    %16 = vector.extract_strided_slice %4 {offsets = [2, 0], sizes = [16, 4], strides = [1, 1]} : vector<24x4xf32> to vector<16x4xf32>
    %c2 = arith.constant 2 : index
    %c0_8 = arith.constant 0 : index
    %c0_9 = arith.constant 0 : index
    %17 = vector.load %arg3[%c2, %c0_8, %c0_9] : memref<3x4x128xf32, #tpu.memory_space<vmem>>, vector<1x4x128xf32>
    %18 = vector.shape_cast %17 : vector<1x4x128xf32> to vector<4x128xf32>
    %cst_10 = arith.constant dense<0.000000e+00> : vector<16x128xf32>
    %19 = tpu.matmul %16, %18, %cst_10 {dimension_numbers = #tpu.dot_dimension_numbers<[1], [0], [0], [1], [0, 0, 1, 1], [], []>} : vector<16x4xf32>, vector<4x128xf32>, vector<16x128xf32> -> vector<16x128xf32>
    %20 = arith.addf %15, %19 : vector<16x128xf32>
    %c0_11 = arith.constant 0 : index
    %c0_12 = arith.constant 0 : index
    %21 = vector.load %arg4[%c0_11, %c0_12] : memref<2x128xf32, #tpu.memory_space<vmem>>, vector<2x128xf32>
    %22 = vector.extract_strided_slice %21 {offsets = [0, 0], sizes = [1, 128], strides = [1, 1]} : vector<2x128xf32> to vector<1x128xf32>
    %23 = vector.broadcast %22 : vector<1x128xf32> to vector<16x128xf32>
    %24 = arith.mulf %20, %23 : vector<16x128xf32>
    %25 = vector.extract_strided_slice %21 {offsets = [1, 0], sizes = [1, 128], strides = [1, 1]} : vector<2x128xf32> to vector<1x128xf32>
    %26 = vector.broadcast %25 : vector<1x128xf32> to vector<16x128xf32>
    %27 = arith.addf %24, %26 : vector<16x128xf32>
    %cst_13 = arith.constant 0.000000e+00 : f32
    %28 = vector.broadcast %cst_13 : f32 to vector<16x128xf32>
    %29 = arith.maximumf %27, %28 : vector<16x128xf32>
    %c0_14 = arith.constant 0 : index
    %c0_15 = arith.constant 0 : index
    %c0_16 = arith.constant 0 : index
    %30 = vector.load %arg5[%c0_14, %c0_15, %c0_16] : memref<1x16x128xf32, #tpu.memory_space<vmem>>, vector<1x16x128xf32>
    %31 = vector.shape_cast %30 : vector<1x16x128xf32> to vector<16x128xf32>
    %32 = vector.shape_cast %29 : vector<16x128xf32> to vector<1x16x128xf32>
    tpu.vector_store %arg5[%c0_14, %c0_15, %c0_16], %32 {strides = array<i32>} : memref<1x16x128xf32, #tpu.memory_space<vmem>>, vector<1x16x128xf32>,
    return
  }
  func.func @transform_0(%arg0: i32, %arg1: i32) -> (i32, i32, i32) {
    %c0_i32 = arith.constant 0 : i32
    %c0_i32_0 = arith.constant 0 : i32
    %c0_i32_1 = arith.constant 0 : i32
    return %arg0, %c0_i32, %c0_i32_0 : i32, i32, i32
  }
  func.func @transform_1(%arg0: i32, %arg1: i32) -> (i32, i32, i32) {
    %c0_i32 = arith.constant 0 : i32
    %c0_i32_0 = arith.constant 0 : i32
    %c0_i32_1 = arith.constant 0 : i32
    %c0_i32_2 = arith.constant 0 : i32
    return %c0_i32, %c0_i32_0, %c0_i32_1 : i32, i32, i32
  }
  func.func @transform_2(%arg0: i32, %arg1: i32) -> (i32, i32) {
    %c0_i32 = arith.constant 0 : i32
    %c0_i32_0 = arith.constant 0 : i32
    %c0_i32_1 = arith.constant 0 : i32
    return %c0_i32, %c0_i32_0 : i32, i32
  }
  func.func @transform_3(%arg0: i32, %arg1: i32) -> (i32, i32, i32) {
    %c0_i32 = arith.constant 0 : i32
    %c0_i32_0 = arith.constant 0 : i32
    return %arg0, %arg1, %c0_i32 : i32, i32, i32
  }
}

</mosaic_0001>

<llo_original>
// kernel: conv_block_forward.3
$region0: #{conv_block_forward.3}
  #allocation0 [shape = 'u32[]', space=smem, size = 0x4, offset = 0x4, fixed_abs, tag = 'smem constant byte address 0x4 - core index']
  #allocation1 [shape = 'u32[144,128]{1,0:T(1,128)}', space=vmem, size = 0x12000, scoped, tag = 'internal scratch']
  %s0 = inlined_call_operand.vmem [shape: f32[2,24,4], index: 0, kind: input, shape index: {}]
  %s1 = inlined_call_operand.vmem [shape: f32[3,4,128], index: 1, kind: input, shape index: {}]
  %s2 = inlined_call_operand.vmem [shape: f32[2,128], index: 2, kind: input, shape index: {}]
  %s3 = inlined_call_operand.vmem [shape: f32[2,16,128], index: 3, kind: output, shape index: {}]
  %s4 = sld [smem:[#allocation0]]
  $region45: #{conv_block_forward.3} parent=0
    _
  %s6 = ssub.s32 1, %s4
  %s7 = scalar_select 0, %s6, %s4
  loop: start=0, step=1, limit=4
  $region2: #{conv_block_forward.3} parent=0 // loop_pre_header
    _
  $region3: #{conv_block_forward.3} parent=0 // loop_header
    %s9 = sphi 0, %s13
    %p10 = scmp.ge.s32.totalorder %s9, 4
    %s16 = sphi 0, %s28
    %s17 = sphi 0, %s24
    %s18 = sphi 0, %s16
    %s19 = sphi 0, %s17
    %s20 = sphi 0, %s18
    %s21 = sphi 0, %s19
    %s31 = sphi 0, %s33
    %s34 = sphi 0, %s31
    %s35 = sphi 0, %s34
    %s51 = sphi 0, %s35
    %s55 = sphi 0, %s55
    %s57 = sphi 0, %s55
    %s58 = sphi 0, %s57
    %s72 = sphi 0, %s58
    %s76 = sphi 0, %s76
    %s78 = sphi 0, %s76
    %s79 = sphi 0, %s78
    %s93 = sphi 0, %s79
    %s101 = sphi 0, %s103
    %s104 = sphi 0, %s101
    %s105 = sphi 0, %s104
    %s121 = sphi 0, %s105
  $region4: #{conv_block_forward.3} parent=0 // loop_header_branch
    %12 = sbr.rel (%p10) target = $region8
  $region5: #{conv_block_forward.3} parent=0 // loop_body
    %s14 = ssub.s32 %s9, 1
    %s15 = ssub.s32 %s9, 2
    %s22 = sadd.s32 1, %s17
    %p23 = scmp.ge.s32.totalorder %s22, 1
    %s24 = scalar_select %p23, 0, %s22
    %s25 = sadd.s32 1, %s16
    %s26 = scalar_select %p23, %s25, %s16
    %p27 = scmp.ge.s32.totalorder %s26, 2
    %s28 = scalar_select %p27, 0, %s26
    %s29 = ssub.s32 %s16, %s28
    %p30 = scmp.eq.s32.totalorder %s29, 0
    %s32 = sadd.s32 %s31, 1
    %s33 = scalar_select %p30, %s31, %s32
    %p36 = pneg %p30
    %p37 = scmp.eq.s32.totalorder %s9, 1
    %p38 = por %p36, %p37
    %p39 = scmp.ne.s32.totalorder %s31, %s34
    %p40 = scmp.eq.s32.totalorder %s9, 0
    %p41 = por %p39, %p40
    %p42 = scmp.ne.s32.totalorder %s31, %s34
    %p43 = scmp.eq.s32.totalorder %s14, 1
    %p44 = por %p42, %p43
    %p45 = scmp.ne.s32.totalorder %s34, %s35
    %p46 = scmp.eq.s32.totalorder %s14, 0
    %p47 = por %p45, %p46
    %p48 = scmp.ne.s32.totalorder %s34, %s35
    %p49 = scmp.eq.s32.totalorder %s15, 1
    %p50 = por %p48, %p49
    %p52 = scmp.ne.s32.totalorder %s35, %s51
    %p53 = scmp.eq.s32.totalorder %s15, 0
    %p54 = por %p52, %p53
    %s56 = sadd.s32 %s55, 1
    %p59 = scmp.eq.s32.totalorder %s9, 1
    %p60 = scmp.ne.s32.totalorder %s55, %s57
    %p61 = scmp.eq.s32.totalorder %s9, 0
    %p62 = por %p60, %p61
    %p63 = scmp.ne.s32.totalorder %s55, %s57
    %p64 = scmp.eq.s32.totalorder %s14, 1
    %p65 = por %p63, %p64
    %p66 = scmp.ne.s32.totalorder %s57, %s58
    %p67 = scmp.eq.s32.totalorder %s14, 0
    %p68 = por %p66, %p67
    %p69 = scmp.ne.s32.totalorder %s57, %s58
    %p70 = scmp.eq.s32.totalorder %s15, 1
    %p71 = por %p69, %p70
    %p73 = scmp.ne.s32.totalorder %s58, %s72
    %p74 = scmp.eq.s32.totalorder %s15, 0
    %p75 = por %p73, %p74
    %s77 = sadd.s32 %s76, 1
    %p80 = scmp.eq.s32.totalorder %s9, 1
    %p81 = scmp.ne.s32.totalorder %s76, %s78
    %p82 = scmp.eq.s32.totalorder %s9, 0
    %p83 = por %p81, %p82
    %p84 = scmp.ne.s32.totalorder %s76, %s78
    %p85 = scmp.eq.s32.totalorder %s14, 1
    %p86 = por %p84, %p85
    %p87 = scmp.ne.s32.totalorder %s78, %s79
    %p88 = scmp.eq.s32.totalorder %s14, 0
    %p89 = por %p87, %p88
    %p90 = scmp.ne.s32.totalorder %s78, %s79
    %p91 = scmp.eq.s32.totalorder %s15, 1
    %p92 = por %p90, %p91
    %p94 = scmp.ne.s32.totalorder %s79, %s93
    %p95 = scmp.eq.s32.totalorder %s15, 0
    %p96 = por %p94, %p95
    %s97 = ssub.s32 %s16, %s28
    %s98 = ssub.s32 %s17, %s24
    %s99 = sor.u32 %s97, %s98
    %p100 = scmp.eq.s32.totalorder %s99, 0
    %s102 = sadd.s32 %s101, 1
    %s103 = scalar_select %p100, %s101, %s102
    %p106 = pneg %p100
    %p107 = scmp.eq.s32.totalorder %s9, 1
    %p108 = por %p106, %p107
    %p109 = scmp.ne.s32.totalorder %s101, %s104
    %p110 = scmp.eq.s32.totalorder %s9, 0
    %p111 = por %p109, %p110
    %p112 = scmp.ne.s32.totalorder %s101, %s104
    %p113 = scmp.eq.s32.totalorder %s14, 1
    %p114 = por %p112, %p113
    %p115 = scmp.ne.s32.totalorder %s104, %s105
    %p116 = scmp.eq.s32.totalorder %s14, 0
    %p117 = por %p115, %p116
    %p118 = scmp.ne.s32.totalorder %s104, %s105
    %p119 = scmp.eq.s32.totalorder %s15, 1
    %p120 = por %p118, %p119
    %p122 = scmp.ne.s32.totalorder %s105, %s121
    %p123 = scmp.eq.s32.totalorder %s15, 0
    %p124 = por %p122, %p123
    %p125 = scmp.le.s32.totalorder 1, %s9
    %p126 = scmp.lt.s32.totalorder %s9, 3
    %p127 = pnand %p125, %p126
    %p128 = pneg %p127
    // Predicated region
    $region9: #{conv_block_forward.3} parent=5 // pred_check
      _
    $region10: #{conv_block_forward.3} parent=5 // pred_check_branch
      %130 = sbr.rel (%p127) target = $region12
    $region11: #{conv_block_forward.3} parent=5 // pred_region
      %s131 = ssub.s32 %s9, 1
      // Predicated region
      $region13: #{conv_block_forward.3} parent=11 // pred_check
        %p132 = pneg %p68
      $region14: #{conv_block_forward.3} parent=11 // pred_check_branch
        %134 = sbr.rel (%p132) target = $region16
      $region15: #{conv_block_forward.3} parent=11 // pred_region
        _
      $region16: #{conv_block_forward.3} parent=11 // pred_fallthru
        _
      // Predicated region
      $region17: #{conv_block_forward.3} parent=11 // pred_check
        %p135 = pneg %p89
      $region18: #{conv_block_forward.3} parent=11 // pred_check_branch
        %137 = sbr.rel (%p135) target = $region20
      $region19: #{conv_block_forward.3} parent=11 // pred_region
        _
      $region20: #{conv_block_forward.3} parent=11 // pred_fallthru
        _
    $region12: #{conv_block_forward.3} parent=5 // pred_fallthru
      _
    %p138 = scmp.lt.s32.totalorder %s9, 2
    // Predicated region
    $region21: #{conv_block_forward.3} parent=5 // pred_check
      %p139 = pneg %p138
    $region22: #{conv_block_forward.3} parent=5 // pred_check_branch
      %141 = sbr.rel (%p139) target = $region24
    $region23: #{conv_block_forward.3} parent=5 // pred_region
      // Predicated region
      $region25: #{conv_block_forward.3} parent=23 // pred_check
        %p142 = pneg %p41
      $region26: #{conv_block_forward.3} parent=23 // pred_check_branch
        %144 = sbr.rel (%p142) target = $region28
      $region27: #{conv_block_forward.3} parent=23 // pred_region
        %p145 = scmp.lt.s32.totalorder %s16, 1
        %s146 = scalar_select %p145, %s16, 1
        %s147 = smul.addr %s146, 3
        %s148 = smul.addr %s147, 8
        %s149 = scalar_lea.vmem %s0, %s148
      $region28: #{conv_block_forward.3} parent=23 // pred_fallthru
        _
    $region24: #{conv_block_forward.3} parent=5 // pred_fallthru
      _
    %p150 = scmp.le.s32.totalorder 1, %s9
    %p151 = scmp.lt.s32.totalorder %s9, 3
    %p152 = pnand %p150, %p151
    %p153 = pneg %p152
    // Predicated region
    $region29: #{conv_block_forward.3} parent=5 // pred_check
      _
    $region30: #{conv_block_forward.3} parent=5 // pred_check_branch
      %155 = sbr.rel (%p152) target = $region32
    $region31: #{conv_block_forward.3} parent=5 // pred_region
      %s156 = ssub.s32 %s9, 1
      %p157 = scmp.lt.s32.totalorder %s18, 1
      %s158 = scalar_select %p157, %s18, 1
      %s159 = smul.addr %s158, 3
      %s160 = smul.addr %s159, 8
      %s161 = scalar_lea.vmem %s0, %s160
      %p162 = pneg %p47
      %p163 = pneg %p44
      %p164 = pneg %p68
      %p165 = pneg %p65
      %p166 = pneg %p89
      %p167 = pneg %p86
      %p168 = pneg %p117
      %p169 = pneg %p114
      %s170 = smul.u32 2, %s19
      %p171 = scmp.lt.s32.totalorder %s18, 1
      %s172 = scalar_select %p171, %s18, 1
      %p173 = scmp.lt.s32.totalorder %s170, 1
      %s174 = scalar_select %p173, %s170, 1
      %s175 = smul.addr %s172, 2
      %s176 = sadd.s32 %s174, %s175
      %s177 = smul.addr %s176, 8
      %s178 = scalar_lea.vmem %s3, %s177
      %p179 = scmp.lt.s32.totalorder %s18, 1
      %s180 = scalar_select %p179, %s18, 1
      %s181 = smul.addr %s180, 3
      %s182 = smul.addr %s181, 8
      %s183 = scalar_lea.vmem %s0, %s182
      %s184 = smul.u32 2, %s19
      %p185 = scmp.lt.s32.totalorder %s18, 1
      %s186 = scalar_select %p185, %s18, 1
      %p187 = scmp.lt.s32.totalorder %s184, 1
      %s188 = scalar_select %p187, %s184, 1
      %s189 = smul.addr %s186, 2
      %s190 = sadd.s32 %s188, %s189
      %s191 = smul.addr %s190, 8
      %s192 = scalar_lea.vmem %s3, %s191
      %s193 = smul.u32 2, %s19
      %s194 = smul.u32 %s19, 16
      %s195 = scalar_lea.vmem %s183, %s194
      %v196 = vld [vmem:[%s195] sm:$0xff]
      %v197 = vld [vmem:[%s195 + $0x8] sm:$0xff]
      %v198 = vld [vmem:[%s195 + $0x10] sm:$0xff]
      %v199 = vld [vmem:[%s1] sm:$0xf]
      %s200 = scalar_lea.vmem %s1, 4
      %v201 = vld [vmem:[%s200] sm:$0xf]
      %vm205 = vcmask 1046528
      %v206 = vrot.slane %v196, 1
      %v207 = vrot.slane %v197, 1
      %v208 = vsel %vm205, %v206, %v207
      %v209 = vrot.slane %v198, 1
      %v210 = vsel %vm205, %v207, %v209
      %vm211 = vcmask 31744
      %v212 = vsel %vm211, %v208, 0
      %v214 = vsel %vm211, %v210, 0
      %vm216 = vcmask 1043456
      %v218 = vsel %vm216, %v201, 0
      %220 = vmatprep.subr.mxu0 0.0
      %221 = vmatpush1.msra.mxu0 0.0
      %222 = vmatprep.subr.mxu0 0.0
      %223 = vmatpush1.msra.mxu0 0.0
      %224 = vmatprep.subr.mxu0 0.0
      %225 = vmatpush1.msra.mxu0 0.0
      %226 = vmatprep.subr.mxu0 0.0
      %227 = vmatpush1.msra.mxu0 0.0
      %228 = vmatprep.subr.mxu0 0.0
      %229 = vmatpush1.msra.mxu0 0.0
      %230 = vmatprep.subr.mxu0 0.0
      %231 = vmatpush1.msra.mxu0 0.0
      %232 = vmatprep.subr.mxu0 0.0
      %233 = vmatpush1.msra.mxu0 0.0
      %234 = vmatprep.subr.mxu0 0.0
      %235 = vmatpush1.msra.mxu0 0.0
      %236 = vmatprep.subr.mxu0 0.0
      %237 = vmatpush1.msra.mxu0 0.0
      %238 = vmatprep.subr.mxu0 0.0
      %239 = vmatpush1.msra.mxu0 0.0
      %240 = vmatprep.subr.mxu0 0.0
      %241 = vmatpush1.msra.mxu0 0.0
      %242 = vmatprep.subr.mxu0 0.0
      %243 = vmatpush1.msra.mxu0 0.0
      %244 = vmatprep.subr.mxu0 0.0
      %245 = vmatpush1.msra.mxu0 0.0
      %246 = vmatprep.subr.mxu0 0.0
      %247 = vmatpush1.msra.mxu0 0.0
      %248 = vmatprep.subr.mxu0 0.0
      %249 = vmatpush1.msra.mxu0 0.0
      %250 = vmatprep.subr.mxu0 0.0
      %251 = vmatpush1.msra.mxu0 %v218
      %252 = vmatprep.subr.mxu0 0.0
      %253 = vmatpush2.msra.mxu0 0.0
      %254 = vmatprep.subr.mxu0 0.0
      %255 = vmatpush2.msra.mxu0 0.0
      %256 = vmatprep.subr.mxu0 0.0
      %257 = vmatpush2.msra.mxu0 0.0
      %258 = vmatprep.subr.mxu0 0.0
      %259 = vmatpush2.msra.mxu0 0.0
      %260 = vmatprep.subr.mxu0 0.0
      %261 = vmatpush2.msra.mxu0 0.0
      %262 = vmatprep.subr.mxu0 0.0
      %263 = vmatpush2.msra.mxu0 0.0
      %264 = vmatprep.subr.mxu0 0.0
      %265 = vmatpush2.msra.mxu0 0.0
      %266 = vmatprep.subr.mxu0 0.0
      %267 = vmatpush2.msra.mxu0 0.0
      %268 = vmatprep.subr.mxu0 0.0
      %269 = vmatpush2.msra.mxu0 0.0
      %270 = vmatprep.subr.mxu0 0.0
      %271 = vmatpush2.msra.mxu0 0.0
      %272 = vmatprep.subr.mxu0 0.0
      %273 = vmatpush2.msra.mxu0 0.0
      %274 = vmatprep.subr.mxu0 0.0
      %275 = vmatpush2.msra.mxu0 0.0
      %276 = vmatprep.subr.mxu0 0.0
      %277 = vmatpush2.msra.mxu0 0.0
      %278 = vmatprep.subr.mxu0 0.0
      %279 = vmatpush2.msra.mxu0 0.0
      %280 = vmatprep.subr.mxu0 0.0
      %281 = vmatpush2.msra.mxu0 0.0
      %282 = vmatprep.subr.mxu0 0.0
      %283 = vmatpush2.msra.mxu0 0.0
      %284 = vmatprep.mubr.f32.mxu0 0.0
      %285 = vmatmul.mubr.f32.gmra.mxu0 %v212
      %v286 = vpop.f32.mrf.mxu0
      %v287 = vadd.f32 0.0, %v286
      %v288 = vpop.f32.mrf.mxu0
      %289 = vmatprep.mubr.f32.mxu0 0.0
      %290 = vmatmul.mubr.f32.gmra.mxu0 %v214
      %v291 = vpop.f32.mrf.mxu0
      %v292 = vadd.f32 0.0, %v291
      %v293 = vpop.f32.mrf.mxu0
      %294 = vdwg.mxu0
      %v295 = vsel %vm211, %v196, 0
      %v297 = vsel %vm211, %v197, 0
      %v300 = vsel %vm216, %v199, 0
      %302 = vmatprep.subr.mxu0 0.0
      %303 = vmatpush1.msra.mxu0 0.0
      %304 = vmatprep.subr.mxu0 0.0
      %305 = vmatpush1.msra.mxu0 0.0
      %306 = vmatprep.subr.mxu0 0.0
      %307 = vmatpush1.msra.mxu0 0.0
      %308 = vmatprep.subr.mxu0 0.0
      %309 = vmatpush1.msra.mxu0 0.0
      %310 = vmatprep.subr.mxu0 0.0
      %311 = vmatpush1.msra.mxu0 0.0
      %312 = vmatprep.subr.mxu0 0.0
      %313 = vmatpush1.msra.mxu0 0.0
      %314 = vmatprep.subr.mxu0 0.0
      %315 = vmatpush1.msra.mxu0 0.0
      %316 = vmatprep.subr.mxu0 0.0
      %317 = vmatpush1.msra.mxu0 0.0
      %318 = vmatprep.subr.mxu0 0.0
      %319 = vmatpush1.msra.mxu0 0.0
      %320 = vmatprep.subr.mxu0 0.0
      %321 = vmatpush1.msra.mxu0 0.0
      %322 = vmatprep.subr.mxu0 0.0
      %323 = vmatpush1.msra.mxu0 0.0
      %324 = vmatprep.subr.mxu0 0.0
      %325 = vmatpush1.msra.mxu0 0.0
      %326 = vmatprep.subr.mxu0 0.0
      %327 = vmatpush1.msra.mxu0 0.0
      %328 = vmatprep.subr.mxu0 0.0
      %329 = vmatpush1.msra.mxu0 0.0
      %330 = vmatprep.subr.mxu0 0.0
      %331 = vmatpush1.msra.mxu0 0.0
      %332 = vmatprep.subr.mxu0 0.0
      %333 = vmatpush1.msra.mxu0 %v300
      %334 = vmatprep.subr.mxu0 0.0
      %335 = vmatpush2.msra.mxu0 0.0
      %336 = vmatprep.subr.mxu0 0.0
      %337 = vmatpush2.msra.mxu0 0.0
      %338 = vmatprep.subr.mxu0 0.0
      %339 = vmatpush2.msra.mxu0 0.0
      %340 = vmatprep.subr.mxu0 0.0
      %341 = vmatpush2.msra.mxu0 0.0
      %342 = vmatprep.subr.mxu0 0.0
      %343 = vmatpush2.msra.mxu0 0.0
      %344 = vmatprep.subr.mxu0 0.0
      %345 = vmatpush2.msra.mxu0 0.0
      %346 = vmatprep.subr.mxu0 0.0
      %347 = vmatpush2.msra.mxu0 0.0
      %348 = vmatprep.subr.mxu0 0.0
      %349 = vmatpush2.msra.mxu0 0.0
      %350 = vmatprep.subr.mxu0 0.0
      %351 = vmatpush2.msra.mxu0 0.0
      %352 = vmatprep.subr.mxu0 0.0
      %353 = vmatpush2.msra.mxu0 0.0
      %354 = vmatprep.subr.mxu0 0.0
      %355 = vmatpush2.msra.mxu0 0.0
      %356 = vmatprep.subr.mxu0 0.0
      %357 = vmatpush2.msra.mxu0 0.0
      %358 = vmatprep.subr.mxu0 0.0
      %359 = vmatpush2.msra.mxu0 0.0
      %360 = vmatprep.subr.mxu0 0.0
      %361 = vmatpush2.msra.mxu0 0.0
      %362 = vmatprep.subr.mxu0 0.0
      %363 = vmatpush2.msra.mxu0 0.0
      %364 = vmatprep.subr.mxu0 0.0
      %365 = vmatpush2.msra.mxu0 0.0
      %366 = vmatprep.mubr.f32.mxu0 0.0
      %367 = vmatmul.mubr.f32.gmra.mxu0 %v295
      %v368 = vpop.f32.mrf.mxu0
      %v369 = vadd.f32 %v287, %v368
      %v370 = vpop.f32.mrf.mxu0
      %371 = vmatprep.mubr.f32.mxu0 0.0
      %372 = vmatmul.mubr.f32.gmra.mxu0 %v297
      %v373 = vpop.f32.mrf.mxu0
      %v374 = vadd.f32 %v292, %v373
      %v375 = vpop.f32.mrf.mxu0
      %376 = vdwg.mxu0
      %s377 = scalar_lea.vmem %s1, 8
      %v378 = vld [vmem:[%s377] sm:$0xf]
      %vm379 = vcmask 1045504
      %v380 = vrot.slane %v196, 2
      %v381 = vrot.slane %v197, 2
      %v382 = vsel %vm379, %v380, %v381
      %v383 = vrot.slane %v198, 2
      %v384 = vsel %vm379, %v381, %v383
      %v385 = vsel %vm211, %v382, 0
      %v387 = vsel %vm211, %v384, 0
      %v390 = vsel %vm216, %v378, 0
      %392 = vmatprep.subr.mxu0 0.0
      %393 = vmatpush1.msra.mxu0 0.0
      %394 = vmatprep.subr.mxu0 0.0
      %395 = vmatpush1.msra.mxu0 0.0
      %396 = vmatprep.subr.mxu0 0.0
      %397 = vmatpush1.msra.mxu0 0.0
      %398 = vmatprep.subr.mxu0 0.0
      %399 = vmatpush1.msra.mxu0 0.0
      %400 = vmatprep.subr.mxu0 0.0
      %401 = vmatpush1.msra.mxu0 0.0
      %402 = vmatprep.subr.mxu0 0.0
      %403 = vmatpush1.msra.mxu0 0.0
      %404 = vmatprep.subr.mxu0 0.0
      %405 = vmatpush1.msra.mxu0 0.0
      %406 = vmatprep.subr.mxu0 0.0
      %407 = vmatpush1.msra.mxu0 0.0
      %408 = vmatprep.subr.mxu0 0.0
      %409 = vmatpush1.msra.mxu0 0.0
      %410 = vmatprep.subr.mxu0 0.0
      %411 = vmatpush1.msra.mxu0 0.0
      %412 = vmatprep.subr.mxu0 0.0
      %413 = vmatpush1.msra.mxu0 0.0
      %414 = vmatprep.subr.mxu0 0.0
      %415 = vmatpush1.msra.mxu0 0.0
      %416 = vmatprep.subr.mxu0 0.0
      %417 = vmatpush1.msra.mxu0 0.0
      %418 = vmatprep.subr.mxu0 0.0
      %419 = vmatpush1.msra.mxu0 0.0
      %420 = vmatprep.subr.mxu0 0.0
      %421 = vmatpush1.msra.mxu0 0.0
      %422 = vmatprep.subr.mxu0 0.0
      %423 = vmatpush1.msra.mxu0 %v390
      %424 = vmatprep.subr.mxu0 0.0
      %425 = vmatpush2.msra.mxu0 0.0
      %426 = vmatprep.subr.mxu0 0.0
      %427 = vmatpush2.msra.mxu0 0.0
      %428 = vmatprep.subr.mxu0 0.0
      %429 = vmatpush2.msra.mxu0 0.0
      %430 = vmatprep.subr.mxu0 0.0
      %431 = vmatpush2.msra.mxu0 0.0
      %432 = vmatprep.subr.mxu0 0.0
      %433 = vmatpush2.msra.mxu0 0.0
      %434 = vmatprep.subr.mxu0 0.0
      %435 = vmatpush2.msra.mxu0 0.0
      %436 = vmatprep.subr.mxu0 0.0
      %437 = vmatpush2.msra.mxu0 0.0
      %438 = vmatprep.subr.mxu0 0.0
      %439 = vmatpush2.msra.mxu0 0.0
      %440 = vmatprep.subr.mxu0 0.0
      %441 = vmatpush2.msra.mxu0 0.0
      %442 = vmatprep.subr.mxu0 0.0
      %443 = vmatpush2.msra.mxu0 0.0
      %444 = vmatprep.subr.mxu0 0.0
      %445 = vmatpush2.msra.mxu0 0.0
      %446 = vmatprep.subr.mxu0 0.0
      %447 = vmatpush2.msra.mxu0 0.0
      %448 = vmatprep.subr.mxu0 0.0
      %449 = vmatpush2.msra.mxu0 0.0
      %450 = vmatprep.subr.mxu0 0.0
      %451 = vmatpush2.msra.mxu0 0.0
      %452 = vmatprep.subr.mxu0 0.0
      %453 = vmatpush2.msra.mxu0 0.0
      %454 = vmatprep.subr.mxu0 0.0
      %455 = vmatpush2.msra.mxu0 0.0
      %456 = vmatprep.mubr.f32.mxu0 0.0
      %457 = vmatmul.mubr.f32.gmra.mxu0 %v385
      %v458 = vpop.f32.mrf.mxu0
      %v459 = vadd.f32 0.0, %v458
      %v460 = vpop.f32.mrf.mxu0
      %461 = vmatprep.mubr.f32.mxu0 0.0
      %462 = vmatmul.mubr.f32.gmra.mxu0 %v387
      %v463 = vpop.f32.mrf.mxu0
      %v464 = vadd.f32 0.0, %v463
      %v465 = vpop.f32.mrf.mxu0
      %466 = vdwg.mxu0
      %v467 = vadd.f32 %v369, %v459
      %v468 = vadd.f32 %v374, %v464
      %v469 = vld [vmem:[%s2] sm:$0x3]
      %v470 = vlaneseq
      %v471 = vshrl.u32 %v470, 7
      %v472 = vsub.s32 0, %v471
      %v473 = vrot.slane %v469, %v472
      %v474 = vmul.f32 %v467, %v473
      %v475 = vmul.f32 %v468, %v473
      %v476 = vlaneseq
      %v477 = vshrl.u32 %v476, 7
      %v478 = vsub.s32 1, %v477
      %v479 = vrot.slane %v469, %v478
      %v480 = vadd.f32 %v474, %v479
      %v481 = vadd.f32 %v475, %v479
      %v482 = vmax.f32 %v480, 0.0
      %v483 = vmax.f32 %v481, 0.0
      %484 = vst [vmem:[%s192] sm:$0xff] %v482
      %485 = vst [vmem:[%s192 + $0x8] sm:$0xff] %v483
      %s486 = smul.u32 2, %s19
      %p487 = scmp.lt.s32.totalorder %s18, 1
      %s488 = scalar_select %p487, %s18, 1
      %p489 = scmp.lt.s32.totalorder %s486, 1
      %s490 = scalar_select %p489, %s486, 1
      %s491 = smul.addr %s488, 2
      %s492 = sadd.s32 %s490, %s491
      %s493 = smul.addr %s492, 8
      %s494 = scalar_lea.vmem %s3, %s493
      // Predicated region
      $region33: #{conv_block_forward.3} parent=31 // pred_check
        %p495 = pneg %p114
      $region34: #{conv_block_forward.3} parent=31 // pred_check_branch
        %497 = sbr.rel (%p495) target = $region36
      $region35: #{conv_block_forward.3} parent=31 // pred_region
        %s498 = smul.u32 2, %s19
      $region36: #{conv_block_forward.3} parent=31 // pred_fallthru
        _
    $region32: #{conv_block_forward.3} parent=5 // pred_fallthru
      _
    %p499 = scmp.le.s32.totalorder 2, %s9
    // Predicated region
    $region37: #{conv_block_forward.3} parent=5 // pred_check
      %p500 = pneg %p499
    $region38: #{conv_block_forward.3} parent=5 // pred_check_branch
      %502 = sbr.rel (%p500) target = $region40
    $region39: #{conv_block_forward.3} parent=5 // pred_region
      %s503 = ssub.s32 %s9, 2
      // Predicated region
      $region41: #{conv_block_forward.3} parent=39 // pred_check
        %p504 = pneg %p120
      $region42: #{conv_block_forward.3} parent=39 // pred_check_branch
        %506 = sbr.rel (%p504) target = $region44
      $region43: #{conv_block_forward.3} parent=39 // pred_region
        %s507 = smul.u32 2, %s21
        %p508 = scmp.lt.s32.totalorder %s20, 1
        %s509 = scalar_select %p508, %s20, 1
        %p510 = scmp.lt.s32.totalorder %s507, 1
        %s511 = scalar_select %p510, %s507, 1
        %s512 = smul.addr %s509, 2
        %s513 = sadd.s32 %s511, %s512
        %s514 = smul.addr %s513, 8
        %s515 = scalar_lea.vmem %s3, %s514
      $region44: #{conv_block_forward.3} parent=39 // pred_fallthru
        _
    $region40: #{conv_block_forward.3} parent=5 // pred_fallthru
      _
  $region6: #{conv_block_forward.3} parent=0 // loop_footer
    %s13 = sadd.s32 1, %s9
  $region7: #{conv_block_forward.3} parent=0 // loop_footer_branch
    %8 = sbr.rel target = $region3
  $region8: #{conv_block_forward.3} parent=0 // loop_exit
    _

// kernel: conv_block_forward.2
$region0: #{conv_block_forward.2}
  #allocation0 [shape = 'u32[]', space=smem, size = 0x4, offset = 0x4, fixed_abs, tag = 'smem constant byte address 0x4 - core index']
  #allocation1 [shape = 'u32[144,128]{1,0:T(1,128)}', space=vmem, size = 0x12000, scoped, tag = 'internal scratch']
  %s0 = inlined_call_operand.vmem [shape: f32[2,24,4], index: 0, kind: input, shape index: {}]
  %s1 = inlined_call_operand.vmem [shape: f32[3,4,128], index: 1, kind: input, shape index: {}]
  %s2 = inlined_call_operand.vmem [shape: f32[2,2,128], index: 2, kind: output, shape index: {}]
  %s3 = sld [smem:[#allocation0]]
  $region45: #{conv_block_forward.2} parent=0
    _
  %s5 = ssub.s32 1, %s3
  %s6 = scalar_select 0, %s5, %s3
  loop: start=0, step=1, limit=4
  $region2: #{conv_block_forward.2} parent=0 // loop_pre_header
    _
  $region3: #{conv_block_forward.2} parent=0 // loop_header
    %s8 = sphi 0, %s12
    %p9 = scmp.ge.s32.totalorder %s8, 4
    %s15 = sphi 0, %s27
    %s16 = sphi 0, %s23
    %s17 = sphi 0, %s15
    %s18 = sphi 0, %s16
    %s19 = sphi 0, %s17
    %s20 = sphi 0, %s18
    %s30 = sphi 0, %s32
    %s33 = sphi 0, %s30
    %s34 = sphi 0, %s33
    %s50 = sphi 0, %s34
    %s54 = sphi 0, %s54
    %s56 = sphi 0, %s54
    %s57 = sphi 0, %s56
    %s71 = sphi 0, %s57
    %s77 = sphi 0, %s79
    %s80 = sphi 0, %s77
    %s81 = sphi 0, %s80
    %s97 = sphi 0, %s81
  $region4: #{conv_block_forward.2} parent=0 // loop_header_branch
    %11 = sbr.rel (%p9) target = $region8
  $region5: #{conv_block_forward.2} parent=0 // loop_body
    %s13 = ssub.s32 %s8, 1
    %s14 = ssub.s32 %s8, 2
    %s21 = sadd.s32 1, %s16
    %p22 = scmp.ge.s32.totalorder %s21, 1
    %s23 = scalar_select %p22, 0, %s21
    %s24 = sadd.s32 1, %s15
    %s25 = scalar_select %p22, %s24, %s15
    %p26 = scmp.ge.s32.totalorder %s25, 2
    %s27 = scalar_select %p26, 0, %s25
    %s28 = ssub.s32 %s15, %s27
    %p29 = scmp.eq.s32.totalorder %s28, 0
    %s31 = sadd.s32 %s30, 1
    %s32 = scalar_select %p29, %s30, %s31
    %p35 = pneg %p29
    %p36 = scmp.eq.s32.totalorder %s8, 1
    %p37 = por %p35, %p36
    %p38 = scmp.ne.s32.totalorder %s30, %s33
    %p39 = scmp.eq.s32.totalorder %s8, 0
    %p40 = por %p38, %p39
    %p41 = scmp.ne.s32.totalorder %s30, %s33
    %p42 = scmp.eq.s32.totalorder %s13, 1
    %p43 = por %p41, %p42
    %p44 = scmp.ne.s32.totalorder %s33, %s34
    %p45 = scmp.eq.s32.totalorder %s13, 0
    %p46 = por %p44, %p45
    %p47 = scmp.ne.s32.totalorder %s33, %s34
    %p48 = scmp.eq.s32.totalorder %s14, 1
    %p49 = por %p47, %p48
    %p51 = scmp.ne.s32.totalorder %s34, %s50
    %p52 = scmp.eq.s32.totalorder %s14, 0
    %p53 = por %p51, %p52
    %s55 = sadd.s32 %s54, 1
    %p58 = scmp.eq.s32.totalorder %s8, 1
    %p59 = scmp.ne.s32.totalorder %s54, %s56
    %p60 = scmp.eq.s32.totalorder %s8, 0
    %p61 = por %p59, %p60
    %p62 = scmp.ne.s32.totalorder %s54, %s56
    %p63 = scmp.eq.s32.totalorder %s13, 1
    %p64 = por %p62, %p63
    %p65 = scmp.ne.s32.totalorder %s56, %s57
    %p66 = scmp.eq.s32.totalorder %s13, 0
    %p67 = por %p65, %p66
    %p68 = scmp.ne.s32.totalorder %s56, %s57
    %p69 = scmp.eq.s32.totalorder %s14, 1
    %p70 = por %p68, %p69
    %p72 = scmp.ne.s32.totalorder %s57, %s71
    %p73 = scmp.eq.s32.totalorder %s14, 0
    %p74 = por %p72, %p73
    %s75 = ssub.s32 %s15, %s27
    %p76 = scmp.eq.s32.totalorder %s75, 0
    %s78 = sadd.s32 %s77, 1
    %s79 = scalar_select %p76, %s77, %s78
    %p82 = pneg %p76
    %p83 = scmp.eq.s32.totalorder %s8, 1
    %p84 = por %p82, %p83
    %p85 = scmp.ne.s32.totalorder %s77, %s80
    %p86 = scmp.eq.s32.totalorder %s8, 0
    %p87 = por %p85, %p86
    %p88 = scmp.ne.s32.totalorder %s77, %s80
    %p89 = scmp.eq.s32.totalorder %s13, 1
    %p90 = por %p88, %p89
    %p91 = scmp.ne.s32.totalorder %s80, %s81
    %p92 = scmp.eq.s32.totalorder %s13, 0
    %p93 = por %p91, %p92
    %p94 = scmp.ne.s32.totalorder %s80, %s81
    %p95 = scmp.eq.s32.totalorder %s14, 1
    %p96 = por %p94, %p95
    %p98 = scmp.ne.s32.totalorder %s81, %s97
    %p99 = scmp.eq.s32.totalorder %s14, 0
    %p100 = por %p98, %p99
    %p101 = scmp.le.s32.totalorder 1, %s8
    %p102 = scmp.lt.s32.totalorder %s8, 3
    %p103 = pnand %p101, %p102
    %p104 = pneg %p103
    // Predicated region
    $region9: #{conv_block_forward.2} parent=5 // pred_check
      _
    $region10: #{conv_block_forward.2} parent=5 // pred_check_branch
      %106 = sbr.rel (%p103) target = $region12
    $region11: #{conv_block_forward.2} parent=5 // pred_region
      %s107 = ssub.s32 %s8, 1
      // Predicated region
      $region13: #{conv_block_forward.2} parent=11 // pred_check
        %p108 = pneg %p67
      $region14: #{conv_block_forward.2} parent=11 // pred_check_branch
        %110 = sbr.rel (%p108) target = $region16
      $region15: #{conv_block_forward.2} parent=11 // pred_region
        _
      $region16: #{conv_block_forward.2} parent=11 // pred_fallthru
        _
    $region12: #{conv_block_forward.2} parent=5 // pred_fallthru
      _
    %p111 = scmp.lt.s32.totalorder %s8, 2
    // Predicated region
    $region17: #{conv_block_forward.2} parent=5 // pred_check
      %p112 = pneg %p111
    $region18: #{conv_block_forward.2} parent=5 // pred_check_branch
      %114 = sbr.rel (%p112) target = $region20
    $region19: #{conv_block_forward.2} parent=5 // pred_region
      // Predicated region
      $region21: #{conv_block_forward.2} parent=19 // pred_check
        %p115 = pneg %p40
      $region22: #{conv_block_forward.2} parent=19 // pred_check_branch
        %117 = sbr.rel (%p115) target = $region24
      $region23: #{conv_block_forward.2} parent=19 // pred_region
        %p118 = scmp.lt.s32.totalorder %s15, 1
        %s119 = scalar_select %p118, %s15, 1
        %s120 = smul.addr %s119, 3
        %s121 = smul.addr %s120, 8
        %s122 = scalar_lea.vmem %s0, %s121
      $region24: #{conv_block_forward.2} parent=19 // pred_fallthru
        _
    $region20: #{conv_block_forward.2} parent=5 // pred_fallthru
      _
    %p123 = scmp.le.s32.totalorder 1, %s8
    %p124 = scmp.lt.s32.totalorder %s8, 3
    %p125 = pnand %p123, %p124
    %p126 = pneg %p125
    // Predicated region
    $region25: #{conv_block_forward.2} parent=5 // pred_check
      _
    $region26: #{conv_block_forward.2} parent=5 // pred_check_branch
      %128 = sbr.rel (%p125) target = $region28
    $region27: #{conv_block_forward.2} parent=5 // pred_region
      %s129 = ssub.s32 %s8, 1
      %p130 = scmp.lt.s32.totalorder %s17, 1
      %s131 = scalar_select %p130, %s17, 1
      %s132 = smul.addr %s131, 3
      %s133 = smul.addr %s132, 8
      %s134 = scalar_lea.vmem %s0, %s133
      %p135 = pneg %p46
      %p136 = pneg %p43
      %p137 = pneg %p67
      %p138 = pneg %p64
      %p139 = pneg %p93
      %p140 = pneg %p90
      %p141 = scmp.lt.s32.totalorder %s17, 1
      %s142 = scalar_select %p141, %s17, 1
      %s143 = smul.addr %s142, 2
      %s144 = scalar_lea.vmem %s2, %s143
      %p145 = scmp.lt.s32.totalorder %s17, 1
      %s146 = scalar_select %p145, %s17, 1
      %s147 = smul.addr %s146, 3
      %s148 = smul.addr %s147, 8
      %s149 = scalar_lea.vmem %s0, %s148
      %p150 = scmp.lt.s32.totalorder %s17, 1
      %s151 = scalar_select %p150, %s17, 1
      %s152 = smul.addr %s151, 2
      %s153 = scalar_lea.vmem %s2, %s152
      %p154 = scmp.eq.s32.totalorder %s18, 0
      // Predicated region
      $region29: #{conv_block_forward.2} parent=27 // pred_check
        %p155 = pneg %p154
      $region30: #{conv_block_forward.2} parent=27 // pred_check_branch
        %157 = sbr.rel (%p155) target = $region32
      $region31: #{conv_block_forward.2} parent=27 // pred_region
        %158 = vst [vmem:[%s153] sm:$0x3] 0.0
      $region32: #{conv_block_forward.2} parent=27 // pred_fallthru
        _
      %s159 = smul.u32 %s18, 16
      %s160 = scalar_lea.vmem %s149, %s159
      %v161 = vld [vmem:[%s160] sm:$0xff]
      %v162 = vld [vmem:[%s160 + $0x8] sm:$0xff]
      %v163 = vld [vmem:[%s160 + $0x10] sm:$0xff]
      %v164 = vld [vmem:[%s1] sm:$0xf]
      %s165 = scalar_lea.vmem %s1, 4
      %v166 = vld [vmem:[%s165] sm:$0xf]
      %vm170 = vcmask 1046528
      %v171 = vrot.slane %v161, 1
      %v172 = vrot.slane %v162, 1
      %v173 = vsel %vm170, %v171, %v172
      %v174 = vrot.slane %v163, 1
      %v175 = vsel %vm170, %v172, %v174
      %vm176 = vcmask 31744
      %v177 = vsel %vm176, %v173, 0
      %v179 = vsel %vm176, %v175, 0
      %vm181 = vcmask 1043456
      %v183 = vsel %vm181, %v166, 0
      %185 = vmatprep.subr.mxu0 0.0
      %186 = vmatpush1.msra.mxu0 0.0
      %187 = vmatprep.subr.mxu0 0.0
      %188 = vmatpush1.msra.mxu0 0.0
      %189 = vmatprep.subr.mxu0 0.0
      %190 = vmatpush1.msra.mxu0 0.0
      %191 = vmatprep.subr.mxu0 0.0
      %192 = vmatpush1.msra.mxu0 0.0
      %193 = vmatprep.subr.mxu0 0.0
      %194 = vmatpush1.msra.mxu0 0.0
      %195 = vmatprep.subr.mxu0 0.0
      %196 = vmatpush1.msra.mxu0 0.0
      %197 = vmatprep.subr.mxu0 0.0
      %198 = vmatpush1.msra.mxu0 0.0
      %199 = vmatprep.subr.mxu0 0.0
      %200 = vmatpush1.msra.mxu0 0.0
      %201 = vmatprep.subr.mxu0 0.0
      %202 = vmatpush1.msra.mxu0 0.0
      %203 = vmatprep.subr.mxu0 0.0
      %204 = vmatpush1.msra.mxu0 0.0
      %205 = vmatprep.subr.mxu0 0.0
      %206 = vmatpush1.msra.mxu0 0.0
      %207 = vmatprep.subr.mxu0 0.0
      %208 = vmatpush1.msra.mxu0 0.0
      %209 = vmatprep.subr.mxu0 0.0
      %210 = vmatpush1.msra.mxu0 0.0
      %211 = vmatprep.subr.mxu0 0.0
      %212 = vmatpush1.msra.mxu0 0.0
      %213 = vmatprep.subr.mxu0 0.0
      %214 = vmatpush1.msra.mxu0 0.0
      %215 = vmatprep.subr.mxu0 0.0
      %216 = vmatpush1.msra.mxu0 %v183
      %217 = vmatprep.subr.mxu0 0.0
      %218 = vmatpush2.msra.mxu0 0.0
      %219 = vmatprep.subr.mxu0 0.0
      %220 = vmatpush2.msra.mxu0 0.0
      %221 = vmatprep.subr.mxu0 0.0
      %222 = vmatpush2.msra.mxu0 0.0
      %223 = vmatprep.subr.mxu0 0.0
      %224 = vmatpush2.msra.mxu0 0.0
      %225 = vmatprep.subr.mxu0 0.0
      %226 = vmatpush2.msra.mxu0 0.0
      %227 = vmatprep.subr.mxu0 0.0
      %228 = vmatpush2.msra.mxu0 0.0
      %229 = vmatprep.subr.mxu0 0.0
      %230 = vmatpush2.msra.mxu0 0.0
      %231 = vmatprep.subr.mxu0 0.0
      %232 = vmatpush2.msra.mxu0 0.0
      %233 = vmatprep.subr.mxu0 0.0
      %234 = vmatpush2.msra.mxu0 0.0
      %235 = vmatprep.subr.mxu0 0.0
      %236 = vmatpush2.msra.mxu0 0.0
      %237 = vmatprep.subr.mxu0 0.0
      %238 = vmatpush2.msra.mxu0 0.0
      %239 = vmatprep.subr.mxu0 0.0
      %240 = vmatpush2.msra.mxu0 0.0
      %241 = vmatprep.subr.mxu0 0.0
      %242 = vmatpush2.msra.mxu0 0.0
      %243 = vmatprep.subr.mxu0 0.0
      %244 = vmatpush2.msra.mxu0 0.0
      %245 = vmatprep.subr.mxu0 0.0
      %246 = vmatpush2.msra.mxu0 0.0
      %247 = vmatprep.subr.mxu0 0.0
      %248 = vmatpush2.msra.mxu0 0.0
      %249 = vmatprep.mubr.f32.mxu0 0.0
      %250 = vmatmul.mubr.f32.gmra.mxu0 %v177
      %v251 = vpop.f32.mrf.mxu0
      %v252 = vadd.f32 0.0, %v251
      %v253 = vpop.f32.mrf.mxu0
      %254 = vmatprep.mubr.f32.mxu0 0.0
      %255 = vmatmul.mubr.f32.gmra.mxu0 %v179
      %v256 = vpop.f32.mrf.mxu0
      %v257 = vadd.f32 0.0, %v256
      %v258 = vpop.f32.mrf.mxu0
      %259 = vdwg.mxu0
      %v260 = vsel %vm176, %v161, 0
      %v262 = vsel %vm176, %v162, 0
      %v265 = vsel %vm181, %v164, 0
      %267 = vmatprep.subr.mxu0 0.0
      %268 = vmatpush1.msra.mxu0 0.0
      %269 = vmatprep.subr.mxu0 0.0
      %270 = vmatpush1.msra.mxu0 0.0
      %271 = vmatprep.subr.mxu0 0.0
      %272 = vmatpush1.msra.mxu0 0.0
      %273 = vmatprep.subr.mxu0 0.0
      %274 = vmatpush1.msra.mxu0 0.0
      %275 = vmatprep.subr.mxu0 0.0
      %276 = vmatpush1.msra.mxu0 0.0
      %277 = vmatprep.subr.mxu0 0.0
      %278 = vmatpush1.msra.mxu0 0.0
      %279 = vmatprep.subr.mxu0 0.0
      %280 = vmatpush1.msra.mxu0 0.0
      %281 = vmatprep.subr.mxu0 0.0
      %282 = vmatpush1.msra.mxu0 0.0
      %283 = vmatprep.subr.mxu0 0.0
      %284 = vmatpush1.msra.mxu0 0.0
      %285 = vmatprep.subr.mxu0 0.0
      %286 = vmatpush1.msra.mxu0 0.0
      %287 = vmatprep.subr.mxu0 0.0
      %288 = vmatpush1.msra.mxu0 0.0
      %289 = vmatprep.subr.mxu0 0.0
      %290 = vmatpush1.msra.mxu0 0.0
      %291 = vmatprep.subr.mxu0 0.0
      %292 = vmatpush1.msra.mxu0 0.0
      %293 = vmatprep.subr.mxu0 0.0
      %294 = vmatpush1.msra.mxu0 0.0
      %295 = vmatprep.subr.mxu0 0.0
      %296 = vmatpush1.msra.mxu0 0.0
      %297 = vmatprep.subr.mxu0 0.0
      %298 = vmatpush1.msra.mxu0 %v265
      %299 = vmatprep.subr.mxu0 0.0
      %300 = vmatpush2.msra.mxu0 0.0
      %301 = vmatprep.subr.mxu0 0.0
      %302 = vmatpush2.msra.mxu0 0.0
      %303 = vmatprep.subr.mxu0 0.0
      %304 = vmatpush2.msra.mxu0 0.0
      %305 = vmatprep.subr.mxu0 0.0
      %306 = vmatpush2.msra.mxu0 0.0
      %307 = vmatprep.subr.mxu0 0.0
      %308 = vmatpush2.msra.mxu0 0.0
      %309 = vmatprep.subr.mxu0 0.0
      %310 = vmatpush2.msra.mxu0 0.0
      %311 = vmatprep.subr.mxu0 0.0
      %312 = vmatpush2.msra.mxu0 0.0
      %313 = vmatprep.subr.mxu0 0.0
      %314 = vmatpush2.msra.mxu0 0.0
      %315 = vmatprep.subr.mxu0 0.0
      %316 = vmatpush2.msra.mxu0 0.0
      %317 = vmatprep.subr.mxu0 0.0
      %318 = vmatpush2.msra.mxu0 0.0
      %319 = vmatprep.subr.mxu0 0.0
      %320 = vmatpush2.msra.mxu0 0.0
      %321 = vmatprep.subr.mxu0 0.0
      %322 = vmatpush2.msra.mxu0 0.0
      %323 = vmatprep.subr.mxu0 0.0
      %324 = vmatpush2.msra.mxu0 0.0
      %325 = vmatprep.subr.mxu0 0.0
      %326 = vmatpush2.msra.mxu0 0.0
      %327 = vmatprep.subr.mxu0 0.0
      %328 = vmatpush2.msra.mxu0 0.0
      %329 = vmatprep.subr.mxu0 0.0
      %330 = vmatpush2.msra.mxu0 0.0
      %331 = vmatprep.mubr.f32.mxu0 0.0
      %332 = vmatmul.mubr.f32.gmra.mxu0 %v260
      %v333 = vpop.f32.mrf.mxu0
      %v334 = vadd.f32 %v252, %v333
      %v335 = vpop.f32.mrf.mxu0
      %336 = vmatprep.mubr.f32.mxu0 0.0
      %337 = vmatmul.mubr.f32.gmra.mxu0 %v262
      %v338 = vpop.f32.mrf.mxu0
      %v339 = vadd.f32 %v257, %v338
      %v340 = vpop.f32.mrf.mxu0
      %341 = vdwg.mxu0
      %s342 = scalar_lea.vmem %s1, 8
      %v343 = vld [vmem:[%s342] sm:$0xf]
      %vm344 = vcmask 1045504
      %v345 = vrot.slane %v161, 2
      %v346 = vrot.slane %v162, 2
      %v347 = vsel %vm344, %v345, %v346
      %v348 = vrot.slane %v163, 2
      %v349 = vsel %vm344, %v346, %v348
      %v350 = vsel %vm176, %v347, 0
      %v352 = vsel %vm176, %v349, 0
      %v355 = vsel %vm181, %v343, 0
      %357 = vmatprep.subr.mxu0 0.0
      %358 = vmatpush1.msra.mxu0 0.0
      %359 = vmatprep.subr.mxu0 0.0
      %360 = vmatpush1.msra.mxu0 0.0
      %361 = vmatprep.subr.mxu0 0.0
      %362 = vmatpush1.msra.mxu0 0.0
      %363 = vmatprep.subr.mxu0 0.0
      %364 = vmatpush1.msra.mxu0 0.0
      %365 = vmatprep.subr.mxu0 0.0
      %366 = vmatpush1.msra.mxu0 0.0
      %367 = vmatprep.subr.mxu0 0.0
      %368 = vmatpush1.msra.mxu0 0.0
      %369 = vmatprep.subr.mxu0 0.0
      %370 = vmatpush1.msra.mxu0 0.0
      %371 = vmatprep.subr.mxu0 0.0
      %372 = vmatpush1.msra.mxu0 0.0
      %373 = vmatprep.subr.mxu0 0.0
      %374 = vmatpush1.msra.mxu0 0.0
      %375 = vmatprep.subr.mxu0 0.0
      %376 = vmatpush1.msra.mxu0 0.0
      %377 = vmatprep.subr.mxu0 0.0
      %378 = vmatpush1.msra.mxu0 0.0
      %379 = vmatprep.subr.mxu0 0.0
      %380 = vmatpush1.msra.mxu0 0.0
      %381 = vmatprep.subr.mxu0 0.0
      %382 = vmatpush1.msra.mxu0 0.0
      %383 = vmatprep.subr.mxu0 0.0
      %384 = vmatpush1.msra.mxu0 0.0
      %385 = vmatprep.subr.mxu0 0.0
      %386 = vmatpush1.msra.mxu0 0.0
      %387 = vmatprep.subr.mxu0 0.0
      %388 = vmatpush1.msra.mxu0 %v355
      %389 = vmatprep.subr.mxu0 0.0
      %390 = vmatpush2.msra.mxu0 0.0
      %391 = vmatprep.subr.mxu0 0.0
      %392 = vmatpush2.msra.mxu0 0.0
      %393 = vmatprep.subr.mxu0 0.0
      %394 = vmatpush2.msra.mxu0 0.0
      %395 = vmatprep.subr.mxu0 0.0
      %396 = vmatpush2.msra.mxu0 0.0
      %397 = vmatprep.subr.mxu0 0.0
      %398 = vmatpush2.msra.mxu0 0.0
      %399 = vmatprep.subr.mxu0 0.0
      %400 = vmatpush2.msra.mxu0 0.0
      %401 = vmatprep.subr.mxu0 0.0
      %402 = vmatpush2.msra.mxu0 0.0
      %403 = vmatprep.subr.mxu0 0.0
      %404 = vmatpush2.msra.mxu0 0.0
      %405 = vmatprep.subr.mxu0 0.0
      %406 = vmatpush2.msra.mxu0 0.0
      %407 = vmatprep.subr.mxu0 0.0
      %408 = vmatpush2.msra.mxu0 0.0
      %409 = vmatprep.subr.mxu0 0.0
      %410 = vmatpush2.msra.mxu0 0.0
      %411 = vmatprep.subr.mxu0 0.0
      %412 = vmatpush2.msra.mxu0 0.0
      %413 = vmatprep.subr.mxu0 0.0
      %414 = vmatpush2.msra.mxu0 0.0
      %415 = vmatprep.subr.mxu0 0.0
      %416 = vmatpush2.msra.mxu0 0.0
      %417 = vmatprep.subr.mxu0 0.0
      %418 = vmatpush2.msra.mxu0 0.0
      %419 = vmatprep.subr.mxu0 0.0
      %420 = vmatpush2.msra.mxu0 0.0
      %421 = vmatprep.mubr.f32.mxu0 0.0
      %422 = vmatmul.mubr.f32.gmra.mxu0 %v350
      %v423 = vpop.f32.mrf.mxu0
      %v424 = vadd.f32 0.0, %v423
      %v425 = vpop.f32.mrf.mxu0
      %426 = vmatprep.mubr.f32.mxu0 0.0
      %427 = vmatmul.mubr.f32.gmra.mxu0 %v352
      %v428 = vpop.f32.mrf.mxu0
      %v429 = vadd.f32 0.0, %v428
      %v430 = vpop.f32.mrf.mxu0
      %431 = vdwg.mxu0
      %v432 = vadd.f32 %v334, %v424
      %v433 = vadd.f32 %v339, %v429
      %v434 = vlaneseq
      %v435 = vshrl.u32 %v434, 7
      %v436 = vadd.s32 %v435, 8
      %v437 = vstv %s159
      %v438 = vadd.s32 %v437, %v435
      %v439 = vadd.s32 %v437, %v436
      %vm440 = vcmp.lt.s32.totalorder %v438, 16
      %vm441 = vcmp.lt.s32.totalorder %v439, 16
      %v442 = vsel %vm440, 1, 0
      %v443 = vsel %vm441, 1, 0
      %v444 = vcvt.s32.f32 %v442
      %v445 = vcvt.s32.f32 %v443
      %v446 = vmul.f32 %v432, %v444
      %v447 = vmul.f32 %v433, %v445
      %v448 = vadd.f32 %v446, %v447
      %v449 = vrot.slane %v448, 4
      %v450 = vadd.f32 %v448, %v449
      %v451 = vrot.slane %v450, 2
      %v452 = vadd.f32 %v450, %v451
      %v453 = vrot.slane %v452, 1
      %v454 = vadd.f32 %v452, %v453
      %v455 = vmul.f32 %v446, %v446
      %v456 = vmul.f32 %v447, %v447
      %v457 = vadd.f32 %v455, %v456
      %v458 = vrot.slane %v457, 4
      %v459 = vadd.f32 %v457, %v458
      %v460 = vrot.slane %v459, 2
      %v461 = vadd.f32 %v459, %v460
      %v462 = vrot.slane %v461, 1
      %v463 = vadd.f32 %v461, %v462
      %v464 = vld [vmem:[%s153] sm:$0x3]
      %vm465 = vcmask 1040384
      %v466 = vsel %vm465, %v454, %v463
      %v467 = vadd.f32 %v464, %v466
      %468 = vst [vmem:[%s153] sm:$0x3] %v467
      %p469 = scmp.lt.s32.totalorder %s17, 1
      %s470 = scalar_select %p469, %s17, 1
      %s471 = smul.addr %s470, 2
      %s472 = scalar_lea.vmem %s2, %s471
      // Predicated region
      $region33: #{conv_block_forward.2} parent=27 // pred_check
        %p473 = pneg %p90
      $region34: #{conv_block_forward.2} parent=27 // pred_check_branch
        %475 = sbr.rel (%p473) target = $region36
      $region35: #{conv_block_forward.2} parent=27 // pred_region
        _
      $region36: #{conv_block_forward.2} parent=27 // pred_fallthru
        _
    $region28: #{conv_block_forward.2} parent=5 // pred_fallthru
      _
    %p476 = scmp.le.s32.totalorder 2, %s8
    // Predicated region
    $region37: #{conv_block_forward.2} parent=5 // pred_check
      %p477 = pneg %p476
    $region38: #{conv_block_forward.2} parent=5 // pred_check_branch
      %479 = sbr.rel (%p477) target = $region40
    $region39: #{conv_block_forward.2} parent=5 // pred_region
      %s480 = ssub.s32 %s8, 2
      // Predicated region
      $region41: #{conv_block_forward.2} parent=39 // pred_check
        %p481 = pneg %p96
      $region42: #{conv_block_forward.2} parent=39 // pred_check_branch
        %483 = sbr.rel (%p481) target = $region44
      $region43: #{conv_block_forward.2} parent=39 // pred_region
        %p484 = scmp.lt.s32.totalorder %s19, 1
        %s485 = scalar_select %p484, %s19, 1
        %s486 = smul.addr %s485, 2
        %s487 = scalar_lea.vmem %s2, %s486
      $region44: #{conv_block_forward.2} parent=39 // pred_fallthru
        _
    $region40: #{conv_block_forward.2} parent=5 // pred_fallthru
      _
  $region6: #{conv_block_forward.2} parent=0 // loop_footer
    %s12 = sadd.s32 1, %s8
  $region7: #{conv_block_forward.2} parent=0 // loop_footer_branch
    %7 = sbr.rel target = $region3
  $region8: #{conv_block_forward.2} parent=0 // loop_exit
    _

</llo_original>
